<compile_context>
chip_gen: v7x
topology: tpu7x:2x2x1
jax: 0.10.0
libtpu: 0.0.40
codegen_flags: <defaults>
</compile_context>

<pallas_src>
import math

import numpy as np
import jax
import jax.numpy as jnp
from jax.experimental import pallas as pl
from jax.experimental.pallas import tpu as pltpu

FREQ_EMB_SIZE = 256       # frequency_embedding_size
HIDDEN_SIZE = 128         # hidden_size (small test value; stdit uses ~1152)
MAX_PERIOD = 10000.0

_HALF = FREQ_EMB_SIZE // 2
# Computed once at module load; passed to the kernel as an input (Pallas does
# not allow non-scalar captured constants inside the kernel body).
_FREQS_NP = np.exp(
    -math.log(MAX_PERIOD) * np.arange(_HALF, dtype=np.float32) / float(_HALF)
).reshape(1, _HALF)


def _timestep_embedder_kernel(t_ref, freqs_ref, w1_ref, b1_ref, w2_ref, b2_ref,
                              o_ref):
    half = _HALF

    # --- sinusoidal timestep embedding (float32 math, like the reference) ---
    freqs = freqs_ref[...]                               # (1, half) f32
    t = t_ref[...].astype(jnp.float32)                   # (B, 1)
    args = t * freqs                                     # (B, half)
    cos_a = jnp.cos(args)                                # (B, half) f32
    sin_a = jnp.sin(args)                                # (B, half) f32

    # --- Linear(256->H): split-K over the static cos/sin halves of w1 ------
    # (avoids materializing the (B,256) concat; two K=128 MXU matmuls,
    #  accumulated in f32)
    w_dt = w1_ref.dtype
    h = jnp.dot(cos_a.astype(w_dt), w1_ref[:half, :],
                preferred_element_type=jnp.float32)      # (B, H)
    h = h + jnp.dot(sin_a.astype(w_dt), w1_ref[half:, :],
                    preferred_element_type=jnp.float32)  # (B, H)
    h = h + b1_ref[...].astype(jnp.float32)

    # --- SiLU (f32 on VPU/EUP; do NOT downcast activations) ----------------
    h = h * jax.nn.sigmoid(h)

    # --- Linear(H->H) -------------------------------------------------------
    out = jnp.dot(h.astype(w2_ref.dtype), w2_ref[...],
                  preferred_element_type=jnp.float32)    # (B, H)
    out = out + b2_ref[...].astype(jnp.float32)

    o_ref[...] = out.astype(o_ref.dtype)


def _vmem_limit_bytes(B, H, w_dtype, out_dtype):
    """Derive a VMEM limit from the actual operand sizes (robust at large H)."""
    w_bytes = jnp.dtype(w_dtype).itemsize
    out_bytes = jnp.dtype(out_dtype).itemsize
    total = (
        B * 1 * 4                       # t column (f32)
        + 1 * _HALF * 4                 # freqs
        + FREQ_EMB_SIZE * H * w_bytes   # w1
        + H * H * w_bytes               # w2
        + 2 * H * 4                     # biases (f32)
        + B * H * out_bytes             # output
    )
    # 2x for double-buffering margin + 2 MiB slack for intermediates/scratch.
    limit = 2 * total + (2 << 20)
    return int(min(max(limit, 4 << 20), 64 << 20))


def timestep_embedder(t, w1, b1, w2, b2, out_dtype=jnp.float32):
    """Compute TimestepEmbedder.forward for a batch of timesteps.

    Args:
      t:  [B] float timesteps.  Batch ALL diffusion steps into one call when
          possible — that is the main way to amortize the weight DMA/dispatch.
      w1: [FREQ_EMB_SIZE, H]  (NOTE: [in, out] — transposed vs PyTorch's
          Linear.weight which is [out, in]).
      b1: [H]
      w2: [H, H]              ([in, out])
      b2: [H]
      out_dtype: dtype of the returned embedding.
    Returns: [B, H] timestep embeddings.
    """
    B = t.shape[0]
    assert w1.ndim == 2 and w1.shape[0] == FREQ_EMB_SIZE, (
        "w1 must be [frequency_embedding_size, hidden] = [in, out] "
        "(transpose PyTorch's Linear.weight)")
    H = w1.shape[1]
    assert w2.shape == (H, H), "w2 must be [hidden, hidden] = [in, out]"
    assert b1.shape == (H,) and b2.shape == (H,)

    t2d = t.reshape(B, 1).astype(jnp.float32)
    freqs = jnp.asarray(_FREQS_NP)          # (1, half) f32, trace-time constant
    b1_2d = b1.reshape(1, H)
    b2_2d = b2.reshape(1, H)

    def full(shape):
        return pl.BlockSpec(shape, lambda: tuple(0 for _ in shape))

    return pl.pallas_call(
        _timestep_embedder_kernel,
        out_shape=jax.ShapeDtypeStruct((B, H), out_dtype),
        grid=(),
        in_specs=[
            full((B, 1)),
            full((1, _HALF)),
            full((FREQ_EMB_SIZE, H)),
            full((1, H)),
            full((H, H)),
            full((1, H)),
        ],
        out_specs=full((B, H)),
        compiler_params=pltpu.CompilerParams(
            vmem_limit_bytes=_vmem_limit_bytes(B, H, w1.dtype, out_dtype)),
    )(t2d, freqs, w1, b1_2d, w2, b2_2d)


def _reference(t, w1, b1, w2, b2):
    half = FREQ_EMB_SIZE // 2
    freqs = jnp.exp(
        -math.log(MAX_PERIOD) * jnp.arange(half, dtype=jnp.float32) / half)
    args = t.astype(jnp.float32)[:, None] * freqs[None, :]
    emb = jnp.concatenate([jnp.cos(args), jnp.sin(args)], axis=-1)
    h = emb @ w1.astype(jnp.float32) + b1.astype(jnp.float32)
    h = h * jax.nn.sigmoid(h)
    return h @ w2.astype(jnp.float32) + b2.astype(jnp.float32)


if __name__ == "__main__":
    key = jax.random.PRNGKey(0)
    k_t, k_w1, k_b1, k_w2, k_b2 = jax.random.split(key, 5)

    B = 8
    # timesteps (e.g. diffusion steps in [0, 1000))
    t = jax.random.uniform(k_t, (B,), jnp.float32, 0.0, 1000.0)

    # Deterministic synthetic parameters (Linear weights stored as [in, out]).
    w1 = jax.random.normal(k_w1, (FREQ_EMB_SIZE, HIDDEN_SIZE), jnp.float32) * 0.02
    b1 = jax.random.normal(k_b1, (HIDDEN_SIZE,), jnp.float32) * 0.02
    w2 = jax.random.normal(k_w2, (HIDDEN_SIZE, HIDDEN_SIZE), jnp.float32) * 0.02
    b2 = jax.random.normal(k_b2, (HIDDEN_SIZE,), jnp.float32) * 0.02

    ref = _reference(t, w1, b1, w2, b2)

    # f32-weight path: tight match against the f32 reference.
    out = timestep_embedder(t, w1, b1, w2, b2)
    out = jax.block_until_ready(out)
    assert out.shape == (B, HIDDEN_SIZE)
    assert jnp.allclose(out, ref, atol=1e-4, rtol=1e-4), "f32 mismatch vs reference"

    # bf16-weight path (recommended default on v5e/v6e/v7x: halves weight DMA,
    # single-pass bf16 MXU).  Looser tolerance — weight quantization only.
    out_bf16 = timestep_embedder(t,
                                 w1.astype(jnp.bfloat16), b1,
                                 w2.astype(jnp.bfloat16), b2)
    out_bf16 = jax.block_until_ready(out_bf16)
    assert jnp.allclose(out_bf16, ref, atol=2e-2, rtol=2e-2), \
        "bf16-weight mismatch vs reference"

    print("KERNEL_OK")
</pallas_src>

<mosaic_0001>
module attributes {stable_mosaic.version = 11 : i64} {
  func.func @_timestep_embedder_kernel(%arg0: memref<8x1xf32, #tpu.memory_space<vmem>>, %arg1: memref<1x128xf32, #tpu.memory_space<vmem>>, %arg2: memref<256x128xf32, #tpu.memory_space<vmem>>, %arg3: memref<1x128xf32, #tpu.memory_space<vmem>>, %arg4: memref<128x128xf32, #tpu.memory_space<vmem>>, %arg5: memref<1x128xf32, #tpu.memory_space<vmem>>, %arg6: memref<8x128xf32, #tpu.memory_space<vmem>>) attributes {dimension_semantics = [], scalar_prefetch = 0 : i64, scratch_operands = 0 : i64, tpu.core_type = #tpu.core_type<tc>} {
    %c0 = arith.constant 0 : index
    %c0_0 = arith.constant 0 : index
    %0 = vector.load %arg1[%c0, %c0_0] : memref<1x128xf32, #tpu.memory_space<vmem>>, vector<1x128xf32>
    %c0_1 = arith.constant 0 : index
    %c0_2 = arith.constant 0 : index
    %1 = vector.load %arg0[%c0_1, %c0_2] : memref<8x1xf32, #tpu.memory_space<vmem>>, vector<8x1xf32>
    %2 = vector.broadcast %1 : vector<8x1xf32> to vector<8x128xf32>
    %3 = vector.broadcast %0 : vector<1x128xf32> to vector<8x128xf32>
    %4 = arith.mulf %2, %3 : vector<8x128xf32>
    %5 = math.cos %4 : vector<8x128xf32>
    %6 = math.sin %4 : vector<8x128xf32>
    %c0_3 = arith.constant 0 : index
    %c0_4 = arith.constant 0 : index
    %7 = vector.load %arg2[%c0_3, %c0_4] : memref<256x128xf32, #tpu.memory_space<vmem>>, vector<128x128xf32>
    %cst = arith.constant dense<0.000000e+00> : vector<8x128xf32>
    %8 = tpu.matmul %5, %7, %cst {dimension_numbers = #tpu.dot_dimension_numbers<[1], [0], [0], [1], [0, 0, 1, 1], [], []>} : vector<8x128xf32>, vector<128x128xf32>, vector<8x128xf32> -> vector<8x128xf32>
    %c128 = arith.constant 128 : index
    %c0_5 = arith.constant 0 : index
    %9 = vector.load %arg2[%c128, %c0_5] : memref<256x128xf32, #tpu.memory_space<vmem>>, vector<128x128xf32>
    %cst_6 = arith.constant dense<0.000000e+00> : vector<8x128xf32>
    %10 = tpu.matmul %6, %9, %cst_6 {dimension_numbers = #tpu.dot_dimension_numbers<[1], [0], [0], [1], [0, 0, 1, 1], [], []>} : vector<8x128xf32>, vector<128x128xf32>, vector<8x128xf32> -> vector<8x128xf32>
    %11 = arith.addf %8, %10 : vector<8x128xf32>
    %c0_7 = arith.constant 0 : index
    %c0_8 = arith.constant 0 : index
    %12 = vector.load %arg3[%c0_7, %c0_8] : memref<1x128xf32, #tpu.memory_space<vmem>>, vector<1x128xf32>
    %13 = vector.broadcast %12 : vector<1x128xf32> to vector<8x128xf32>
    %14 = arith.addf %11, %13 : vector<8x128xf32>
    %15 = arith.negf %14 : vector<8x128xf32>
    %16 = math.exp %15 : vector<8x128xf32>
    %cst_9 = arith.constant 1.000000e+00 : f32
    %17 = vector.broadcast %cst_9 : f32 to vector<8x128xf32>
    %18 = arith.addf %17, %16 : vector<8x128xf32>
    %19 = arith.divf %17, %18 : vector<8x128xf32>
    %20 = arith.mulf %14, %19 : vector<8x128xf32>
    %c0_10 = arith.constant 0 : index
    %c0_11 = arith.constant 0 : index
    %21 = vector.load %arg4[%c0_10, %c0_11] : memref<128x128xf32, #tpu.memory_space<vmem>>, vector<128x128xf32>
    %cst_12 = arith.constant dense<0.000000e+00> : vector<8x128xf32>
    %22 = tpu.matmul %20, %21, %cst_12 {dimension_numbers = #tpu.dot_dimension_numbers<[1], [0], [0], [1], [0, 0, 1, 1], [], []>} : vector<8x128xf32>, vector<128x128xf32>, vector<8x128xf32> -> vector<8x128xf32>
    %c0_13 = arith.constant 0 : index
    %c0_14 = arith.constant 0 : index
    %23 = vector.load %arg5[%c0_13, %c0_14] : memref<1x128xf32, #tpu.memory_space<vmem>>, vector<1x128xf32>
    %24 = vector.broadcast %23 : vector<1x128xf32> to vector<8x128xf32>
    %25 = arith.addf %22, %24 : vector<8x128xf32>
    %c0_15 = arith.constant 0 : index
    %c0_16 = arith.constant 0 : index
    %26 = vector.load %arg6[%c0_15, %c0_16] : memref<8x128xf32, #tpu.memory_space<vmem>>, vector<8x128xf32>
    tpu.vector_store %arg6[%c0_15, %c0_16], %25 {strides = array<i32>} : memref<8x128xf32, #tpu.memory_space<vmem>>, vector<8x128xf32>,
    return
  }
}

</mosaic_0001>

<llo_original>
// kernel: tpu_custom_call.1
$region0: #{tpu_custom_call.1}
  #allocation0 [shape = 'u32[]', space=smem, size = 0x4, offset = 0x4, fixed_abs, tag = 'smem constant byte address 0x4 - core index']
  #allocation1 [shape = 'u32[144,128]{1,0:T(1,128)}', space=vmem, size = 0x12000, scoped, tag = 'internal scratch']
  %s0 = inlined_call_operand.vmem [shape: f32[8,1], index: 0, kind: input, shape index: {}]
  %s1 = inlined_call_operand.vmem [shape: f32[1,128], index: 1, kind: input, shape index: {}]
  %s2 = inlined_call_operand.hbm [shape: f32[256,128], index: 2, kind: input, shape index: {}]
  %s3 = inlined_call_operand.vmem [shape: f32[1,128], index: 3, kind: input, shape index: {}]
  %s4 = inlined_call_operand.hbm [shape: f32[128,128], index: 4, kind: input, shape index: {}]
  %s5 = inlined_call_operand.vmem [shape: f32[1,128], index: 5, kind: input, shape index: {}]
  %s6 = inlined_call_operand.hbm [shape: f32[8,128], index: 6, kind: output, shape index: {}]
  %s7 = sld [smem:[#allocation0]]
  $region42: #{tpu_custom_call.1} parent=0
    _
  %s9 = ssub.s32 1, %s7
  %s10 = scalar_select 0, %s9, %s7
  $region1: #{tpu_custom_call.1} parent=0
    #allocation2 [shape = 'u8[131072]{0}', space=vmem, size = 0x20000, scoped, tag = 'input window, operand 2, single buffered']
    #allocation3 [shape = 's32[1]{0}', space=sflag, size = 0x4, scoped, tag = 'scoped memory for tpu_custom_call.1']
    #allocation4 [shape = 's32[1]{0}', space=sflag, size = 0x4, scoped, tag = 'scoped memory for tpu_custom_call.1']
    #allocation5 [shape = 'u8[65536]{0}', space=vmem, size = 0x10000, scoped, tag = 'input window, operand 4, single buffered']
    #allocation6 [shape = 's32[1]{0}', space=sflag, size = 0x4, scoped, tag = 'scoped memory for tpu_custom_call.1']
    #allocation7 [shape = 'u8[4096]{0}', space=vmem, size = 0x1000, scoped, tag = 'output window, operand 0, single buffered']
    %11 = vsyncpa [#allocation3], 0
    %12 = vsyncpa [#allocation6], 0
    %13 = vsyncpa [#allocation4], 0
    // Predicated region
    $region2: #{tpu_custom_call.1} parent=1 // pred_check
      _
    $region3: #{tpu_custom_call.1} parent=1 // pred_check_branch
      %15 = sbr.rel (0) target = $region5
    $region4: #{tpu_custom_call.1} parent=1 // pred_region
      _
    $region5: #{tpu_custom_call.1} parent=1 // pred_fallthru
      _
    // Predicated region
    $region6: #{tpu_custom_call.1} parent=1 // pred_check
      _
    $region7: #{tpu_custom_call.1} parent=1 // pred_check_branch
      %17 = sbr.rel (0) target = $region9
    $region8: #{tpu_custom_call.1} parent=1 // pred_region
      _
    $region9: #{tpu_custom_call.1} parent=1 // pred_fallthru
      _
    // Predicated region
    $region10: #{tpu_custom_call.1} parent=1 // pred_check
      _
    $region11: #{tpu_custom_call.1} parent=1 // pred_check_branch
      %19 = sbr.rel (0) target = $region13
    $region12: #{tpu_custom_call.1} parent=1 // pred_region
      %s21 = ssub.s32 4096, 4096
      %22 = vsyncadd [#allocation3], %s21
      %s23 = sshll.u32 [#allocation2], 4
      %s24 = int_to_ptr.vmem [resolvable:$true] %s23
      %29 = dma.hbm_to_vmem [thread:$0]  %s2, 4096, %s24, [#allocation3], 128, 128, 8
    $region13: #{tpu_custom_call.1} parent=1 // pred_fallthru
      _
    // Predicated region
    $region14: #{tpu_custom_call.1} parent=1 // pred_check
      _
    $region15: #{tpu_custom_call.1} parent=1 // pred_check_branch
      %31 = sbr.rel (0) target = $region17
    $region16: #{tpu_custom_call.1} parent=1 // pred_region
      _
    $region17: #{tpu_custom_call.1} parent=1 // pred_fallthru
      _
    // Predicated region
    $region18: #{tpu_custom_call.1} parent=1 // pred_check
      _
    $region19: #{tpu_custom_call.1} parent=1 // pred_check_branch
      %33 = sbr.rel (0) target = $region21
    $region20: #{tpu_custom_call.1} parent=1 // pred_region
      %s35 = ssub.s32 2048, 2048
      %36 = vsyncadd [#allocation6], %s35
      %s37 = sshll.u32 [#allocation5], 4
      %s38 = int_to_ptr.vmem [resolvable:$true] %s37
      %43 = dma.hbm_to_vmem [thread:$0]  %s4, 2048, %s38, [#allocation6], 128, 128, 8
    $region21: #{tpu_custom_call.1} parent=1 // pred_fallthru
      _
    // Predicated region
    $region22: #{tpu_custom_call.1} parent=1 // pred_check
      _
    $region23: #{tpu_custom_call.1} parent=1 // pred_check_branch
      %45 = sbr.rel (0) target = $region25
    $region24: #{tpu_custom_call.1} parent=1 // pred_region
      _
    $region25: #{tpu_custom_call.1} parent=1 // pred_fallthru
      _
    // Predicated region
    $region26: #{tpu_custom_call.1} parent=1 // pred_check
      _
    $region27: #{tpu_custom_call.1} parent=1 // pred_check_branch
      %47 = sbr.rel (0) target = $region29
    $region28: #{tpu_custom_call.1} parent=1 // pred_region
      %48 = dma.done [#allocation3], 4096
    $region29: #{tpu_custom_call.1} parent=1 // pred_fallthru
      _
    // Predicated region
    $region30: #{tpu_custom_call.1} parent=1 // pred_check
      _
    $region31: #{tpu_custom_call.1} parent=1 // pred_check_branch
      %50 = sbr.rel (0) target = $region33
    $region32: #{tpu_custom_call.1} parent=1 // pred_region
      %51 = dma.done [#allocation6], 2048
    $region33: #{tpu_custom_call.1} parent=1 // pred_fallthru
      _
    %v52 = vld [vmem:[%s1] sm:$0x1]
    %v53 = vld [vmem:[%s0] sm:$0xff]
    %55 = vset.pattern.permute.xlu0 0
    %56 = vperm.xlu0 %55, %v53
    %v57 = vpop.permute.xlu0 %56
    %v60 = vlaneseq
    %v61 = vshrl.u32 %v60, 7
    %v62 = vsub.s32 0, %v61
    %v63 = vrot.slane %v52, %v62
    %v65 = vmul.f32 %v57, %v63
    %v66 = vand.u32 2147483647, %v65
    %vm67 = vcmp.le.f32.partialorder %v66, 0.7853982
    %vm68 = vcmp.lt.s32.totalorder %v65, 0
    %v69 = vand.u32 %v65, 2139095040
    %v70 = vshrl.u32 %v69, 23
    %v71 = vsub.s32 %v70, 127
    %v72 = vand.u32 2147483647, %v65
    %v73 = vand.u32 %v72, 8388607
    %v74 = vor.u32 %v73, 8388608
    %v75 = vsub.s32 0, %v74
    %v76 = vadd.s32 %v71, 1
    %vm77 = vcmp.gt.s32.totalorder %v76, 0
    %v78 = vsel %vm77, %v76, 0
    %v79 = vshrl.u32 %v78, 5
    %v80 = vand.u32 %v78, 31
    %v81 = vsub.s32 32, %v80
    %v82 = vshrl.u32 683565275, %v81
    %v83 = vshll.u32 683565275, %v80
    %v84 = vshrl.u32 2475754826, %v81
    %v85 = vor.u32 %v83, %v84
    %v86 = vshll.u32 2475754826, %v80
    %v87 = vshrl.u32 2131351028, %v81
    %v88 = vor.u32 %v86, %v87
    %v89 = vshll.u32 2131351028, %v80
    %v90 = vshrl.u32 2102212464, %v81
    %v91 = vor.u32 %v89, %v90
    %v92 = vshll.u32 2102212464, %v80
    %v93 = vshrl.u32 920167782, %v81
    %v94 = vor.u32 %v92, %v93
    %v95 = vshll.u32 920167782, %v80
    %v96 = vshrl.u32 1326507024, %v81
    %v97 = vor.u32 %v95, %v96
    %vm98 = vcmp.lt.s32.totalorder %v79, 1
    %vm99 = vcmp.lt.s32.totalorder %v79, 2
    %vm100 = vcmp.lt.s32.totalorder %v79, 3
    %vm101 = vcmp.lt.s32.totalorder %v79, 4
    %v102 = vsel %vm98, %v82, %v85
    %v103 = vsel %vm101, %v91, 2102212464
    %v104 = vsel %vm100, %v88, %v103
    %v105 = vsel %vm99, %v102, %v104
    %v106 = vsel %vm98, %v85, %v88
    %v107 = vsel %vm101, %v94, 920167782
    %v108 = vsel %vm100, %v91, %v107
    %v109 = vsel %vm99, %v106, %v108
    %v110 = vsel %vm98, %v88, %v91
    %v111 = vsel %vm101, %v97, 1326507024
    %v112 = vsel %vm100, %v94, %v111
    %v113 = vsel %vm99, %v110, %v112
    %v114 = vshll.u32 %v74, 8
    %v115 = vmul.u32.u64.compose %v114, %v113
    %v116 = vextract.low.u32 %v115
    %v117 = vextract.high.u32 %v115
    %v118 = vmul.u32.u64.compose %v114, %v109
    %v119 = vextract.low.u32 %v118
    %v120 = vextract.high.u32 %v118
    %v121 = vmul.u32 %v114, %v105
    %v122 = vadd.s32 %v117, %v119
    %vm123 = vc.u32 %v117, %v119
    %v124 = vadd.s32 %v120, 1
    %v125 = vsel %vm123, %v124, %v120
    %v126 = vadd.s32 %v121, %v125
    %v127 = vadd.s32 %v126, 536870912
    %v128 = vshrl.u32 %v127, 30
    %v129 = vshll.u32 %v128, 30
    %v130 = vsub.s32 %v126, %v129
    %vm131 = vcmp.lt.s32.totalorder %v130, 0
    %v132 = vsub.s32 0, %v130
    %v133 = vsel %vm131, %v132, %v130
    %v134 = vclz %v133
    %v135 = vsub.s32 %v134, 2
    %vm136 = vcmp.gt.s32.totalorder 0, %v135
    %v137 = vsel %vm136, 0, %v135
    %v138 = vsub.s32 32, %v137
    %v139 = vshll.u32 %v130, %v137
    %v140 = vshrl.u32 %v122, %v138
    %v141 = vor.u32 %v139, %v140
    %v142 = vsub.s32 4294967266, %v137
    %v143 = vadd.s32 %v142, 127
    %v144 = vshll.u32 %v143, 23
    %v145 = vor.u32 4788187, %v144
    %v146 = vand.u32 2147483647, %v145
    %v148 = vcvt.s32.f32 %v141
    %v149 = vmul.f32 %v148, %v146
    %v150 = vxor.u32 %v149, 2147483648
    %v151 = vsel %vm68, %v150, %v149
    %v152 = vsub.s32 4, %v128
    %v153 = vsel %vm68, %v152, %v128
    %v154 = vsel %vm67, %v65, %v151
    %v155 = vsel %vm67, 0, %v153
    %v156 = vcosq.f32.pop %v154
    %v157 = vsinq.f32.pop %v154
    %vm158 = vweird.f32 %v65
    %v159 = vand.u32 %v155, 3
    %vm160 = vcmp.lt.s32.totalorder %v159, 2
    %vm161 = vcmp.eq.s32.totalorder %v159, 0
    %v162 = vxor.u32 %v157, 2147483648
    %v163 = vsel %vm161, %v156, %v162
    %vm164 = vcmp.eq.s32.totalorder %v159, 2
    %v165 = vxor.u32 %v156, 2147483648
    %v166 = vsel %vm164, %v165, %v157
    %v167 = vsel %vm160, %v163, %v166
    %v168 = vsel %vm158, nan, %v167
    %v169 = vand.u32 2147483647, %v65
    %vm170 = vcmp.le.f32.partialorder %v169, 0.7853982
    %vm171 = vcmp.lt.s32.totalorder %v65, 0
    %v172 = vand.u32 %v65, 2139095040
    %v173 = vshrl.u32 %v172, 23
    %v174 = vsub.s32 %v173, 127
    %v175 = vand.u32 2147483647, %v65
    %v176 = vand.u32 %v175, 8388607
    %v177 = vor.u32 %v176, 8388608
    %v178 = vsub.s32 0, %v177
    %v179 = vadd.s32 %v174, 1
    %vm180 = vcmp.gt.s32.totalorder %v179, 0
    %v181 = vsel %vm180, %v179, 0
    %v182 = vshrl.u32 %v181, 5
    %v183 = vand.u32 %v181, 31
    %v184 = vsub.s32 32, %v183
    %v185 = vshrl.u32 683565275, %v184
    %v186 = vshll.u32 683565275, %v183
    %v187 = vshrl.u32 2475754826, %v184
    %v188 = vor.u32 %v186, %v187
    %v189 = vshll.u32 2475754826, %v183
    %v190 = vshrl.u32 2131351028, %v184
    %v191 = vor.u32 %v189, %v190
    %v192 = vshll.u32 2131351028, %v183
    %v193 = vshrl.u32 2102212464, %v184
    %v194 = vor.u32 %v192, %v193
    %v195 = vshll.u32 2102212464, %v183
    %v196 = vshrl.u32 920167782, %v184
    %v197 = vor.u32 %v195, %v196
    %v198 = vshll.u32 920167782, %v183
    %v199 = vshrl.u32 1326507024, %v184
    %v200 = vor.u32 %v198, %v199
    %vm201 = vcmp.lt.s32.totalorder %v182, 1
    %vm202 = vcmp.lt.s32.totalorder %v182, 2
    %vm203 = vcmp.lt.s32.totalorder %v182, 3
    %vm204 = vcmp.lt.s32.totalorder %v182, 4
    %v205 = vsel %vm201, %v185, %v188
    %v206 = vsel %vm204, %v194, 2102212464
    %v207 = vsel %vm203, %v191, %v206
    %v208 = vsel %vm202, %v205, %v207
    %v209 = vsel %vm201, %v188, %v191
    %v210 = vsel %vm204, %v197, 920167782
    %v211 = vsel %vm203, %v194, %v210
    %v212 = vsel %vm202, %v209, %v211
    %v213 = vsel %vm201, %v191, %v194
    %v214 = vsel %vm204, %v200, 1326507024
    %v215 = vsel %vm203, %v197, %v214
    %v216 = vsel %vm202, %v213, %v215
    %v217 = vshll.u32 %v177, 8
    %v218 = vmul.u32.u64.compose %v217, %v216
    %v219 = vextract.low.u32 %v218
    %v220 = vextract.high.u32 %v218
    %v221 = vmul.u32.u64.compose %v217, %v212
    %v222 = vextract.low.u32 %v221
    %v223 = vextract.high.u32 %v221
    %v224 = vmul.u32 %v217, %v208
    %v225 = vadd.s32 %v220, %v222
    %vm226 = vc.u32 %v220, %v222
    %v227 = vadd.s32 %v223, 1
    %v228 = vsel %vm226, %v227, %v223
    %v229 = vadd.s32 %v224, %v228
    %v230 = vadd.s32 %v229, 536870912
    %v231 = vshrl.u32 %v230, 30
    %v232 = vshll.u32 %v231, 30
    %v233 = vsub.s32 %v229, %v232
    %vm234 = vcmp.lt.s32.totalorder %v233, 0
    %v235 = vsub.s32 0, %v233
    %v236 = vsel %vm234, %v235, %v233
    %v237 = vclz %v236
    %v238 = vsub.s32 %v237, 2
    %vm239 = vcmp.gt.s32.totalorder 0, %v238
    %v240 = vsel %vm239, 0, %v238
    %v241 = vsub.s32 32, %v240
    %v242 = vshll.u32 %v233, %v240
    %v243 = vshrl.u32 %v225, %v241
    %v244 = vor.u32 %v242, %v243
    %v245 = vsub.s32 4294967266, %v240
    %v246 = vadd.s32 %v245, 127
    %v247 = vshll.u32 %v246, 23
    %v248 = vor.u32 4788187, %v247
    %v249 = vand.u32 2147483647, %v248
    %v251 = vcvt.s32.f32 %v244
    %v252 = vmul.f32 %v251, %v249
    %v253 = vxor.u32 %v252, 2147483648
    %v254 = vsel %vm171, %v253, %v252
    %v255 = vsub.s32 4, %v231
    %v256 = vsel %vm171, %v255, %v231
    %v257 = vsel %vm170, %v65, %v254
    %v258 = vsel %vm170, 0, %v256
    %v259 = vcosq.f32.pop %v257
    %v260 = vsinq.f32.pop %v257
    %vm261 = vweird.f32 %v65
    %v262 = vadd.s32 %v258, 3
    %v263 = vand.u32 %v262, 3
    %vm264 = vcmp.lt.s32.totalorder %v263, 2
    %vm265 = vcmp.eq.s32.totalorder %v263, 0
    %v266 = vxor.u32 %v260, 2147483648
    %v267 = vsel %vm265, %v259, %v266
    %vm268 = vcmp.eq.s32.totalorder %v263, 2
    %v269 = vxor.u32 %v259, 2147483648
    %v270 = vsel %vm268, %v269, %v260
    %v271 = vsel %vm264, %v267, %v270
    %v272 = vsel %vm261, nan, %v271
    %v273 = vld [vmem:[#allocation2] sm:$0xff]
    %v274 = vld [vmem:[#allocation2 + $0x8] sm:$0xff]
    %v275 = vld [vmem:[#allocation2 + $0x10] sm:$0xff]
    %v276 = vld [vmem:[#allocation2 + $0x18] sm:$0xff]
    %v277 = vld [vmem:[#allocation2 + $0x20] sm:$0xff]
    %v278 = vld [vmem:[#allocation2 + $0x28] sm:$0xff]
    %v279 = vld [vmem:[#allocation2 + $0x30] sm:$0xff]
    %v280 = vld [vmem:[#allocation2 + $0x38] sm:$0xff]
    %v281 = vld [vmem:[#allocation2 + $0x40] sm:$0xff]
    %v282 = vld [vmem:[#allocation2 + $0x48] sm:$0xff]
    %v283 = vld [vmem:[#allocation2 + $0x50] sm:$0xff]
    %v284 = vld [vmem:[#allocation2 + $0x58] sm:$0xff]
    %v285 = vld [vmem:[#allocation2 + $0x60] sm:$0xff]
    %v286 = vld [vmem:[#allocation2 + $0x68] sm:$0xff]
    %v287 = vld [vmem:[#allocation2 + $0x70] sm:$0xff]
    %v288 = vld [vmem:[#allocation2 + $0x78] sm:$0xff]
    %v289 = vld [vmem:[#allocation2 + $0x80] sm:$0xff]
    %v290 = vld [vmem:[#allocation2 + $0x88] sm:$0xff]
    %v291 = vld [vmem:[#allocation2 + $0x90] sm:$0xff]
    %v292 = vld [vmem:[#allocation2 + $0x98] sm:$0xff]
    %v293 = vld [vmem:[#allocation2 + $0xa0] sm:$0xff]
    %v294 = vld [vmem:[#allocation2 + $0xa8] sm:$0xff]
    %v295 = vld [vmem:[#allocation2 + $0xb0] sm:$0xff]
    %v296 = vld [vmem:[#allocation2 + $0xb8] sm:$0xff]
    %v297 = vld [vmem:[#allocation2 + $0xc0] sm:$0xff]
    %v298 = vld [vmem:[#allocation2 + $0xc8] sm:$0xff]
    %v299 = vld [vmem:[#allocation2 + $0xd0] sm:$0xff]
    %v300 = vld [vmem:[#allocation2 + $0xd8] sm:$0xff]
    %v301 = vld [vmem:[#allocation2 + $0xe0] sm:$0xff]
    %v302 = vld [vmem:[#allocation2 + $0xe8] sm:$0xff]
    %v303 = vld [vmem:[#allocation2 + $0xf0] sm:$0xff]
    %v304 = vld [vmem:[#allocation2 + $0xf8] sm:$0xff]
    %305 = vmatprep.subr.mxu0 0.0
    %306 = vmatpush1.msra.mxu0 %v289
    %307 = vmatprep.subr.mxu0 0.0
    %308 = vmatpush1.msra.mxu0 %v290
    %309 = vmatprep.subr.mxu0 0.0
    %310 = vmatpush1.msra.mxu0 %v291
    %311 = vmatprep.subr.mxu0 0.0
    %312 = vmatpush1.msra.mxu0 %v292
    %313 = vmatprep.subr.mxu0 0.0
    %314 = vmatpush1.msra.mxu0 %v293
    %315 = vmatprep.subr.mxu0 0.0
    %316 = vmatpush1.msra.mxu0 %v294
    %317 = vmatprep.subr.mxu0 0.0
    %318 = vmatpush1.msra.mxu0 %v295
    %319 = vmatprep.subr.mxu0 0.0
    %320 = vmatpush1.msra.mxu0 %v296
    %321 = vmatprep.subr.mxu0 0.0
    %322 = vmatpush1.msra.mxu0 %v297
    %323 = vmatprep.subr.mxu0 0.0
    %324 = vmatpush1.msra.mxu0 %v298
    %325 = vmatprep.subr.mxu0 0.0
    %326 = vmatpush1.msra.mxu0 %v299
    %327 = vmatprep.subr.mxu0 0.0
    %328 = vmatpush1.msra.mxu0 %v300
    %329 = vmatprep.subr.mxu0 0.0
    %330 = vmatpush1.msra.mxu0 %v301
    %331 = vmatprep.subr.mxu0 0.0
    %332 = vmatpush1.msra.mxu0 %v302
    %333 = vmatprep.subr.mxu0 0.0
    %334 = vmatpush1.msra.mxu0 %v303
    %335 = vmatprep.subr.mxu0 0.0
    %336 = vmatpush1.msra.mxu0 %v304
    %337 = vmatprep.subr.mxu0 0.0
    %338 = vmatpush1.msra.mxu0 0.0
    %339 = vmatprep.subr.mxu0 0.0
    %340 = vmatpush1.msra.mxu0 0.0
    %341 = vmatprep.subr.mxu0 0.0
    %342 = vmatpush1.msra.mxu0 0.0
    %343 = vmatprep.subr.mxu0 0.0
    %344 = vmatpush1.msra.mxu0 0.0
    %345 = vmatprep.subr.mxu0 0.0
    %346 = vmatpush1.msra.mxu0 0.0
    %347 = vmatprep.subr.mxu0 0.0
    %348 = vmatpush1.msra.mxu0 0.0
    %349 = vmatprep.subr.mxu0 0.0
    %350 = vmatpush1.msra.mxu0 0.0
    %351 = vmatprep.subr.mxu0 0.0
    %352 = vmatpush1.msra.mxu0 0.0
    %353 = vmatprep.subr.mxu0 0.0
    %354 = vmatpush1.msra.mxu0 0.0
    %355 = vmatprep.subr.mxu0 0.0
    %356 = vmatpush1.msra.mxu0 0.0
    %357 = vmatprep.subr.mxu0 0.0
    %358 = vmatpush1.msra.mxu0 0.0
    %359 = vmatprep.subr.mxu0 0.0
    %360 = vmatpush1.msra.mxu0 0.0
    %361 = vmatprep.subr.mxu0 0.0
    %362 = vmatpush1.msra.mxu0 0.0
    %363 = vmatprep.subr.mxu0 0.0
    %364 = vmatpush1.msra.mxu0 0.0
    %365 = vmatprep.subr.mxu0 0.0
    %366 = vmatpush1.msra.mxu0 0.0
    %367 = vmatprep.subr.mxu0 0.0
    %368 = vmatpush1.msra.mxu0 0.0
    %369 = vmatprep.mubr.f32.mxu0 0.0
    %370 = vmatmul.mubr.f32.gmra.mrb[0].mxu0 %v272
    %v371 = vpop.f32.mrb[0].mxu0
    %v372 = vadd.f32 0.0, %v371
    %v373 = vpop.f32.mrb[0].mxu0
    %374 = vdwg.mxu0
    %375 = vmatprep.subr.mxu0 0.0
    %376 = vmatpush1.msra.mxu0 %v273
    %377 = vmatprep.subr.mxu0 0.0
    %378 = vmatpush1.msra.mxu0 %v274
    %379 = vmatprep.subr.mxu0 0.0
    %380 = vmatpush1.msra.mxu0 %v275
    %381 = vmatprep.subr.mxu0 0.0
    %382 = vmatpush1.msra.mxu0 %v276
    %383 = vmatprep.subr.mxu0 0.0
    %384 = vmatpush1.msra.mxu0 %v277
    %385 = vmatprep.subr.mxu0 0.0
    %386 = vmatpush1.msra.mxu0 %v278
    %387 = vmatprep.subr.mxu0 0.0
    %388 = vmatpush1.msra.mxu0 %v279
    %389 = vmatprep.subr.mxu0 0.0
    %390 = vmatpush1.msra.mxu0 %v280
    %391 = vmatprep.subr.mxu0 0.0
    %392 = vmatpush1.msra.mxu0 %v281
    %393 = vmatprep.subr.mxu0 0.0
    %394 = vmatpush1.msra.mxu0 %v282
    %395 = vmatprep.subr.mxu0 0.0
    %396 = vmatpush1.msra.mxu0 %v283
    %397 = vmatprep.subr.mxu0 0.0
    %398 = vmatpush1.msra.mxu0 %v284
    %399 = vmatprep.subr.mxu0 0.0
    %400 = vmatpush1.msra.mxu0 %v285
    %401 = vmatprep.subr.mxu0 0.0
    %402 = vmatpush1.msra.mxu0 %v286
    %403 = vmatprep.subr.mxu0 0.0
    %404 = vmatpush1.msra.mxu0 %v287
    %405 = vmatprep.subr.mxu0 0.0
    %406 = vmatpush1.msra.mxu0 %v288
    %407 = vmatprep.subr.mxu0 0.0
    %408 = vmatpush1.msra.mxu0 0.0
    %409 = vmatprep.subr.mxu0 0.0
    %410 = vmatpush1.msra.mxu0 0.0
    %411 = vmatprep.subr.mxu0 0.0
    %412 = vmatpush1.msra.mxu0 0.0
    %413 = vmatprep.subr.mxu0 0.0
    %414 = vmatpush1.msra.mxu0 0.0
    %415 = vmatprep.subr.mxu0 0.0
    %416 = vmatpush1.msra.mxu0 0.0
    %417 = vmatprep.subr.mxu0 0.0
    %418 = vmatpush1.msra.mxu0 0.0
    %419 = vmatprep.subr.mxu0 0.0
    %420 = vmatpush1.msra.mxu0 0.0
    %421 = vmatprep.subr.mxu0 0.0
    %422 = vmatpush1.msra.mxu0 0.0
    %423 = vmatprep.subr.mxu0 0.0
    %424 = vmatpush1.msra.mxu0 0.0
    %425 = vmatprep.subr.mxu0 0.0
    %426 = vmatpush1.msra.mxu0 0.0
    %427 = vmatprep.subr.mxu0 0.0
    %428 = vmatpush1.msra.mxu0 0.0
    %429 = vmatprep.subr.mxu0 0.0
    %430 = vmatpush1.msra.mxu0 0.0
    %431 = vmatprep.subr.mxu0 0.0
    %432 = vmatpush1.msra.mxu0 0.0
    %433 = vmatprep.subr.mxu0 0.0
    %434 = vmatpush1.msra.mxu0 0.0
    %435 = vmatprep.subr.mxu0 0.0
    %436 = vmatpush1.msra.mxu0 0.0
    %437 = vmatprep.subr.mxu0 0.0
    %438 = vmatpush1.msra.mxu0 0.0
    %439 = vmatprep.mubr.f32.mxu0 0.0
    %440 = vmatmul.mubr.f32.gmra.mrb[0].mxu0 %v168
    %v441 = vpop.f32.mrb[0].mxu0
    %v442 = vadd.f32 %v372, %v441
    %v443 = vpop.f32.mrb[0].mxu0
    %444 = vdwg.mxu0
    %v445 = vld [vmem:[%s3] sm:$0x1]
    %v447 = vlaneseq
    %v448 = vshrl.u32 %v447, 7
    %v449 = vsub.s32 0, %v448
    %v450 = vrot.slane %v445, %v449
    %v452 = vadd.f32 %v442, %v450
    %v453 = vxor.u32 %v452, 2147483648
    %v454 = vmul.f32 %v453, 1.442695
    %v455 = vpow.pop %v454
    %v456 = vadd.f32 %v455, 1.0
    %v457 = vrcp.pop %v456
    %v458 = vmul.f32 1.0, %v457
    %v459 = vmul.f32 %v452, %v458
    %v460 = vld [vmem:[#allocation5] sm:$0xff]
    %v461 = vld [vmem:[#allocation5 + $0x8] sm:$0xff]
    %v462 = vld [vmem:[#allocation5 + $0x10] sm:$0xff]
    %v463 = vld [vmem:[#allocation5 + $0x18] sm:$0xff]
    %v464 = vld [vmem:[#allocation5 + $0x20] sm:$0xff]
    %v465 = vld [vmem:[#allocation5 + $0x28] sm:$0xff]
    %v466 = vld [vmem:[#allocation5 + $0x30] sm:$0xff]
    %v467 = vld [vmem:[#allocation5 + $0x38] sm:$0xff]
    %v468 = vld [vmem:[#allocation5 + $0x40] sm:$0xff]
    %v469 = vld [vmem:[#allocation5 + $0x48] sm:$0xff]
    %v470 = vld [vmem:[#allocation5 + $0x50] sm:$0xff]
    %v471 = vld [vmem:[#allocation5 + $0x58] sm:$0xff]
    %v472 = vld [vmem:[#allocation5 + $0x60] sm:$0xff]
    %v473 = vld [vmem:[#allocation5 + $0x68] sm:$0xff]
    %v474 = vld [vmem:[#allocation5 + $0x70] sm:$0xff]
    %v475 = vld [vmem:[#allocation5 + $0x78] sm:$0xff]
    %v476 = vld [vmem:[%s5] sm:$0x1]
    %v478 = vlaneseq
    %v479 = vshrl.u32 %v478, 7
    %v480 = vsub.s32 0, %v479
    %v481 = vrot.slane %v476, %v480
    %483 = vmatprep.subr.mxu0 0.0
    %484 = vmatpush1.msra.mxu0 %v460
    %485 = vmatprep.subr.mxu0 0.0
    %486 = vmatpush1.msra.mxu0 %v461
    %487 = vmatprep.subr.mxu0 0.0
    %488 = vmatpush1.msra.mxu0 %v462
    %489 = vmatprep.subr.mxu0 0.0
    %490 = vmatpush1.msra.mxu0 %v463
    %491 = vmatprep.subr.mxu0 0.0
    %492 = vmatpush1.msra.mxu0 %v464
    %493 = vmatprep.subr.mxu0 0.0
    %494 = vmatpush1.msra.mxu0 %v465
    %495 = vmatprep.subr.mxu0 0.0
    %496 = vmatpush1.msra.mxu0 %v466
    %497 = vmatprep.subr.mxu0 0.0
    %498 = vmatpush1.msra.mxu0 %v467
    %499 = vmatprep.subr.mxu0 0.0
    %500 = vmatpush1.msra.mxu0 %v468
    %501 = vmatprep.subr.mxu0 0.0
    %502 = vmatpush1.msra.mxu0 %v469
    %503 = vmatprep.subr.mxu0 0.0
    %504 = vmatpush1.msra.mxu0 %v470
    %505 = vmatprep.subr.mxu0 0.0
    %506 = vmatpush1.msra.mxu0 %v471
    %507 = vmatprep.subr.mxu0 0.0
    %508 = vmatpush1.msra.mxu0 %v472
    %509 = vmatprep.subr.mxu0 0.0
    %510 = vmatpush1.msra.mxu0 %v473
    %511 = vmatprep.subr.mxu0 0.0
    %512 = vmatpush1.msra.mxu0 %v474
    %513 = vmatprep.subr.mxu0 0.0
    %514 = vmatpush1.msra.mxu0 %v475
    %515 = vmatprep.subr.mxu0 0.0
    %516 = vmatpush1.msra.mxu0 0.0
    %517 = vmatprep.subr.mxu0 0.0
    %518 = vmatpush1.msra.mxu0 0.0
    %519 = vmatprep.subr.mxu0 0.0
    %520 = vmatpush1.msra.mxu0 0.0
    %521 = vmatprep.subr.mxu0 0.0
    %522 = vmatpush1.msra.mxu0 0.0
    %523 = vmatprep.subr.mxu0 0.0
    %524 = vmatpush1.msra.mxu0 0.0
    %525 = vmatprep.subr.mxu0 0.0
    %526 = vmatpush1.msra.mxu0 0.0
    %527 = vmatprep.subr.mxu0 0.0
    %528 = vmatpush1.msra.mxu0 0.0
    %529 = vmatprep.subr.mxu0 0.0
    %530 = vmatpush1.msra.mxu0 0.0
    %531 = vmatprep.subr.mxu0 0.0
    %532 = vmatpush1.msra.mxu0 0.0
    %533 = vmatprep.subr.mxu0 0.0
    %534 = vmatpush1.msra.mxu0 0.0
    %535 = vmatprep.subr.mxu0 0.0
    %536 = vmatpush1.msra.mxu0 0.0
    %537 = vmatprep.subr.mxu0 0.0
    %538 = vmatpush1.msra.mxu0 0.0
    %539 = vmatprep.subr.mxu0 0.0
    %540 = vmatpush1.msra.mxu0 0.0
    %541 = vmatprep.subr.mxu0 0.0
    %542 = vmatpush1.msra.mxu0 0.0
    %543 = vmatprep.subr.mxu0 0.0
    %544 = vmatpush1.msra.mxu0 0.0
    %545 = vmatprep.subr.mxu0 0.0
    %546 = vmatpush1.msra.mxu0 0.0
    %547 = vmatprep.mubr.f32.mxu0 0.0
    %548 = vmatmul.mubr.f32.gmra.mrb[0].mxu0 %v459
    %v549 = vpop.f32.mrb[0].mxu0
    %v550 = vadd.f32 %v481, %v549
    %v551 = vpop.f32.mrb[0].mxu0
    %552 = vdwg.mxu0
    %553 = vst [vmem:[#allocation7] sm:$0xff] %v550
    // Predicated region
    $region34: #{tpu_custom_call.1} parent=1 // pred_check
      _
    $region35: #{tpu_custom_call.1} parent=1 // pred_check_branch
      %555 = sbr.rel (0) target = $region37
    $region36: #{tpu_custom_call.1} parent=1 // pred_region
      %s557 = ssub.s32 128, 128
      %558 = vsyncadd [#allocation4], %s557
      %s560 = sshll.u32 [#allocation7], 4
      %s561 = int_to_ptr.vmem [resolvable:$true] %s560
      %563 = dma.vmem_to_hbm [thread:$0]  %s561, 128, %s6, [#allocation4]
    $region37: #{tpu_custom_call.1} parent=1 // pred_fallthru
      _
    // Predicated region
    $region38: #{tpu_custom_call.1} parent=1 // pred_check
      _
    $region39: #{tpu_custom_call.1} parent=1 // pred_check_branch
      %565 = sbr.rel (0) target = $region41
    $region40: #{tpu_custom_call.1} parent=1 // pred_region
      %566 = dma.done [#allocation4], 128
    $region41: #{tpu_custom_call.1} parent=1 // pred_fallthru
      _
    %567 = vsyncpa [#allocation3], 1
    %568 = vsyncpa [#allocation6], 1
    %569 = vsyncpa [#allocation4], 1

</llo_original>
